<compile_context>
chip_gen: v7x
topology: tpu7x:2x2x1
jax: 0.10.0
libtpu: 0.0.40
codegen_flags: <defaults>
</compile_context>

<pallas_src>
import functools
import math
from typing import NamedTuple, Tuple

import jax
import jax.numpy as jnp
from jax.experimental import pallas as pl
from jax.experimental.pallas import tpu as pltpu


def _round_up(x, m):
    return ((x + m - 1) // m) * m


def _gelu(x, approximate=False):
    if approximate:
        # tanh approximation -> EUP slot (effectively free when MXU/VPU binds).
        # Numerics differ slightly from PyTorch's default exact nn.GELU().
        return jax.nn.gelu(x, approximate=True)
    # PyTorch nn.GELU() default: exact erf-based GELU.
    return 0.5 * x * (1.0 + jax.lax.erf(x * (1.0 / math.sqrt(2.0))))


def _vmem_capacity_bytes():
    try:
        return int(pltpu.get_tpu_info().vmem_capacity_bytes)
    except Exception:
        return 64 << 20  # conservative per-core ceiling (v7x)


def _lane_multiple():
    # v6e/v7x MXU is 256-wide -> pad >128 feature dims to 256; keep 128 on v5e.
    try:
        kind = jax.devices()[0].device_kind.lower()
    except Exception:
        return 128
    for old in ("v2", "v3", "v4", "v5"):
        if old in kind:
            return 128
    return 256


def _pad_feature_dim(d, mult, boundary):
    # Tiny input/output dims stay unpadded: a block dim equal to the full array
    # dim is exempt from the (8,128) rule, and this avoids inflating HBM traffic
    # for small feature widths. Hidden dims always pad to full lanes / MXU width.
    if boundary and d < 128:
        return d
    p = _round_up(d, 128)
    if mult > 128 and p > 128:
        p = _round_up(p, mult)
    return p


class PreparedMLP(NamedTuple):
    weights: Tuple  # per layer: [Kp, Np], compute_dtype (bf16)
    biases: Tuple   # per layer: [1, Np], float32
    dims: Tuple     # true layer-boundary dims
    pdims: Tuple    # padded layer-boundary dims
    compute_dtype: object


def prepare_mlp_params(params, compute_dtype=jnp.bfloat16):
    """Pad + cast parameters ONCE (hoisted out of the per-call hot path).

    params: list of (W [in, out], b [out]); W already transposed vs. PyTorch.
    """
    n_layers = len(params)
    dims = tuple([params[0][0].shape[0]] + [w.shape[1] for w, _ in params])
    mult = _lane_multiple()
    pdims = tuple(
        _pad_feature_dim(d, mult, boundary=(i == 0 or i == n_layers))
        for i, d in enumerate(dims)
    )
    ws, bs = [], []
    for li, (w, b) in enumerate(params):
        K, N = w.shape
        Kp, Np = pdims[li], pdims[li + 1]
        w_pad = jnp.zeros((Kp, Np), compute_dtype).at[:K, :N].set(
            w.astype(compute_dtype))
        b_pad = jnp.zeros((1, Np), jnp.float32).at[0, :N].set(
            b.astype(jnp.float32))
        ws.append(w_pad)
        bs.append(b_pad)
    return PreparedMLP(tuple(ws), tuple(bs), dims, pdims, compute_dtype)


# ---------------------------------------------------------------------------
# Main path: fully fused, weights VMEM-resident, grid over batch tiles only.
# ---------------------------------------------------------------------------
def _mlp_fused_kernel(*refs, n_layers, activate_final, approximate_gelu,
                      compute_dtype):
    """refs = (x_ref, w0, b0, ..., w_{L-1}, b_{L-1}, o_ref)."""
    x_ref = refs[0]
    o_ref = refs[-1]

    h = x_ref[...]
    for i in range(n_layers):
        w = refs[1 + 2 * i][...]              # bf16, VMEM-resident
        b = refs[2 + 2 * i][...]              # f32
        # bf16 x bf16 on the MXU, f32 accumulation.
        h = jnp.dot(h.astype(compute_dtype), w,
                    preferred_element_type=jnp.float32)
        h = h + b
        if (i != n_layers - 1) or activate_final:
            h = _gelu(h, approximate=approximate_gelu)
    o_ref[...] = h.astype(o_ref.dtype)


def _fused_forward(x_pad, prepared, activate_final, approximate_gelu,
                   tm, n_tiles, vmem_limit, single_buffer_weights):
    n_layers = len(prepared.weights)
    pdims = prepared.pdims
    Mp = x_pad.shape[0]

    inputs = [x_pad]
    in_specs = [pl.BlockSpec((tm, pdims[0]), lambda i: (i, 0))]

    def const_spec(shape):
        # Constant index_map -> stays VMEM-resident across batch tiles; a second
        # pipeline buffer would only waste VMEM.
        if single_buffer_weights:
            return pl.BlockSpec(shape, lambda i: (0, 0),
                                pipeline_mode=pl.Buffered(1))
        return pl.BlockSpec(shape, lambda i: (0, 0))

    for li in range(n_layers):
        w = prepared.weights[li]
        b = prepared.biases[li]
        inputs += [w, b]
        in_specs += [const_spec(w.shape), const_spec(b.shape)]

    out_specs = pl.BlockSpec((tm, pdims[-1]), lambda i: (i, 0))

    # Advisory cost estimate for XLA's scheduler.
    flops = 2 * Mp * sum(pdims[i] * pdims[i + 1] for i in range(n_layers))
    transc = Mp * sum(pdims[i + 1] for i in range(n_layers)
                      if (i != n_layers - 1) or activate_final)
    bytes_acc = int(
        x_pad.size * x_pad.dtype.itemsize
        + sum(w.size * w.dtype.itemsize for w in prepared.weights)
        + sum(b.size * b.dtype.itemsize for b in prepared.biases)
        + Mp * pdims[-1] * x_pad.dtype.itemsize)
    cost = pl.CostEstimate(flops=int(flops), transcendentals=int(transc),
                           bytes_accessed=bytes_acc)

    kernel = functools.partial(
        _mlp_fused_kernel, n_layers=n_layers, activate_final=activate_final,
        approximate_gelu=approximate_gelu,
        compute_dtype=prepared.compute_dtype)

    return pl.pallas_call(
        kernel,
        out_shape=jax.ShapeDtypeStruct((Mp, pdims[-1]), x_pad.dtype),
        grid_spec=pltpu.PrefetchScalarGridSpec(
            num_scalar_prefetch=0,
            grid=(n_tiles,),
            in_specs=in_specs,
            out_specs=out_specs,
        ),
        compiler_params=pltpu.CompilerParams(
            dimension_semantics=("parallel",),   # batch tiles across TCs (v7x)
            vmem_limit_bytes=int(vmem_limit),
        ),
        cost_estimate=cost,
    )(*inputs)


# ---------------------------------------------------------------------------
# Capacity fallback: per-layer K/N-tiled matmul (+bias +GELU fused in epilogue).
# ---------------------------------------------------------------------------
def _layer_matmul_kernel(x_ref, w_ref, b_ref, o_ref, acc_ref, *,
                         apply_act, approximate_gelu):
    @pl.when(pl.program_id(2) == 0)
    def _():
        acc_ref[...] = jnp.zeros_like(acc_ref)

    acc_ref[...] += jnp.dot(x_ref[...], w_ref[...],
                            preferred_element_type=jnp.float32)

    @pl.when(pl.program_id(2) == pl.num_programs(2) - 1)
    def _():
        h = acc_ref[...] + b_ref[...]
        if apply_act:
            h = _gelu(h, approximate=approximate_gelu)
        o_ref[...] = h.astype(o_ref.dtype)


def _pick_tile(dim_p, cap=512):
    if dim_p <= cap:
        return dim_p
    for t in (cap, 512, 256, 128):
        if t <= cap and dim_p % t == 0:
            return t
    return 128


def _layered_forward(x, prepared, activate_final, approximate_gelu, vmem_cap):
    # TODO(synk): intermediates round-trip HBM here; this is only the capacity
    # fallback for MLPs whose (bf16) weights exceed per-core VMEM.
    M, in_dim = x.shape
    dims, pdims = prepared.dims, prepared.pdims
    n_layers = len(prepared.weights)
    cdtype = prepared.compute_dtype

    tm = min(512, _round_up(M, 8))
    Mp = _round_up(M, tm)

    h = x
    if (Mp, pdims[0]) != x.shape:
        h = jnp.zeros((Mp, pdims[0]), x.dtype).at[:M, :in_dim].set(x)

    vmem_limit = int(min(vmem_cap - (16 << 20), 96 << 20))
    for li in range(n_layers):
        w = prepared.weights[li]
        b = prepared.biases[li]
        Kp, Np = pdims[li], pdims[li + 1]
        apply_act = (li != n_layers - 1) or activate_final
        out_dtype = cdtype if li != n_layers - 1 else x.dtype

        tk = _pick_tile(Kp, 512)
        tn = _pick_tile(Np, 512)
        grid = (Mp // tm, Np // tn, Kp // tk)

        kernel = functools.partial(_layer_matmul_kernel, apply_act=apply_act,
                                   approximate_gelu=approximate_gelu)
        h = pl.pallas_call(
            kernel,
            out_shape=jax.ShapeDtypeStruct((Mp, Np), out_dtype),
            grid_spec=pltpu.PrefetchScalarGridSpec(
                num_scalar_prefetch=0,
                grid=grid,
                in_specs=[
                    pl.BlockSpec((tm, tk), lambda i, j, k: (i, k)),
                    pl.BlockSpec((tk, tn), lambda i, j, k: (k, j)),
                    pl.BlockSpec((1, tn), lambda i, j, k: (0, j)),
                ],
                out_specs=pl.BlockSpec((tm, tn), lambda i, j, k: (i, j)),
                scratch_shapes=[pltpu.VMEM((tm, tn), jnp.float32)],
            ),
            compiler_params=pltpu.CompilerParams(
                dimension_semantics=("parallel", "parallel", "arbitrary"),
                vmem_limit_bytes=vmem_limit,
            ),
        )(h.astype(cdtype), w, b)

    return h[:M, :dims[-1]]


# ---------------------------------------------------------------------------
# Public forward.
# ---------------------------------------------------------------------------
def mlp_forward(x, prepared, activate_final=False, approximate_gelu=False):
    """x: [M, in_dim]; prepared: PreparedMLP. Returns [M, out_dim]."""
    M, in_dim = x.shape
    dims, pdims = prepared.dims, prepared.pdims
    assert in_dim == dims[0]
    out_dim = dims[-1]

    itemsize = jnp.dtype(x.dtype).itemsize
    cdtype_size = jnp.dtype(prepared.compute_dtype).itemsize

    # Resident (single-buffered) weight footprint + per-row live/tile bytes.
    weight_bytes = (sum(w.size * cdtype_size for w in prepared.weights)
                    + sum(b.size * 4 for b in prepared.biases))
    max_p = max(pdims)
    row_bytes = (pdims[0] * itemsize * 2        # double-buffered x tile
                 + pdims[-1] * itemsize * 2     # double-buffered out tile
                 + max_p * 4 * 4)               # live intermediates (f32-ish)

    vmem_cap = _vmem_capacity_bytes()           # 128 MiB v5e/v6e, 64 MiB v7x
    budget = vmem_cap - (20 << 20)              # compiler / pipeline headroom

    tm = 0
    for cand in (512, 256, 128, 64, 32, 16, 8):
        if weight_bytes + cand * row_bytes <= budget:
            tm = cand
            break
    if tm == 0:
        # Weights can't be VMEM-resident on this generation -> tiled fallback.
        return _layered_forward(x, prepared, activate_final, approximate_gelu,
                                vmem_cap)

    tm = min(tm, _round_up(M, 8))
    # Ensure >=2 batch tiles so the "parallel" axis feeds both v7x TensorCores.
    if _round_up(M, tm) // tm < 2 and M > 8:
        tm = max(8, _round_up(pl.cdiv(M, 2), 8))

    Mp = _round_up(M, tm)
    n_tiles = Mp // tm

    if (Mp, pdims[0]) == x.shape:
        x_pad = x
    else:
        x_pad = jnp.zeros((Mp, pdims[0]), x.dtype).at[:M, :in_dim].set(x)

    needed = weight_bytes + tm * row_bytes
    vmem_limit = int(min(max(2 * needed + (8 << 20), 32 << 20),
                         vmem_cap - (16 << 20)))
    vmem_limit = max(vmem_limit, 16 << 20)

    try:
        out_pad = _fused_forward(x_pad, prepared, activate_final,
                                 approximate_gelu, tm, n_tiles, vmem_limit,
                                 single_buffer_weights=True)
    except Exception:
        # Older jax without BlockSpec(pipeline_mode=pl.Buffered(1)) support.
        out_pad = _fused_forward(x_pad, prepared, activate_final,
                                 approximate_gelu, tm, n_tiles, vmem_limit,
                                 single_buffer_weights=False)

    return out_pad[:M, :out_dim]


# ---------------------------------------------------------------------------
# Init + reference + test.
# ---------------------------------------------------------------------------
def init_mlp_params(key, in_dim, out_dim, hidden_dim, n_layers,
                    dtype=jnp.float32):
    """Deterministic init matching nn.Linear default shapes.

    Returns list of (W [in, out], b [out]) — W already transposed vs. PyTorch.
    """
    dims = [in_dim] + [hidden_dim] * (n_layers - 1) + [out_dim]
    params = []
    for i in range(len(dims) - 1):
        fan_in, fan_out = dims[i], dims[i + 1]
        key, kw, kb = jax.random.split(key, 3)
        bound = 1.0 / math.sqrt(fan_in)
        w = jax.random.uniform(kw, (fan_in, fan_out), dtype, -bound, bound)
        bias = jax.random.uniform(kb, (fan_out,), dtype, -bound, bound)
        params.append((w, bias))
    return params


def mlp_reference(x, params, activate_final=False):
    n = len(params)
    for i, (w, b) in enumerate(params):
        x = x @ w + b
        if (i != n - 1) or activate_final:
            x = _gelu(x)
    return x


if __name__ == "__main__":
    key = jax.random.PRNGKey(0)
    batch, in_dim, hidden_dim, out_dim, n_layers = 2, 16, 32, 8, 3

    kx, kp = jax.random.split(key)
    x = jax.random.normal(kx, (batch, in_dim), jnp.float32)
    params = init_mlp_params(kp, in_dim, out_dim, hidden_dim, n_layers)

    prepared = prepare_mlp_params(params)      # pad + bf16-cast ONCE
    out = mlp_forward(x, prepared, activate_final=False)
    out = jax.block_until_ready(out)

    ref = mlp_reference(x, params, activate_final=False)
    assert out.shape == (batch, out_dim)
    # bf16 MXU feed (f32 accumulate): loose tolerance vs. the f32 reference.
    assert jnp.allclose(out, ref, atol=5e-2, rtol=5e-2), "mismatch vs reference"

    print("KERNEL_OK")
</pallas_src>

<mosaic_0001>
module attributes {stable_mosaic.version = 11 : i64} {
  func.func @_mlp_fused_kernel(%arg0: i32, %arg1: memref<8x16xf32, #tpu.memory_space<vmem>>, %arg2: memref<16x128xbf16, #tpu.memory_space<vmem>>, %arg3: memref<1x128xf32, #tpu.memory_space<vmem>>, %arg4: memref<128x128xbf16, #tpu.memory_space<vmem>>, %arg5: memref<1x128xf32, #tpu.memory_space<vmem>>, %arg6: memref<128x8xbf16, #tpu.memory_space<vmem>>, %arg7: memref<1x8xf32, #tpu.memory_space<vmem>>, %arg8: memref<8x8xf32, #tpu.memory_space<vmem>>) attributes {dimension_semantics = [#tpu.dimension_semantics<parallel>], iteration_bounds = array<i64: 1>, scalar_prefetch = 0 : i64, scratch_operands = 0 : i64, tpu.core_type = #tpu.core_type<tc>, window_params = [{transform_indices = @transform_0, window_bounds = array<i64: 8, 16>}, {pipeline_mode = #tpu.pipeline_mode<synchronous>, transform_indices = @transform_1, window_bounds = array<i64: 16, 128>}, {pipeline_mode = #tpu.pipeline_mode<synchronous>, transform_indices = @transform_2, window_bounds = array<i64: 1, 128>}, {pipeline_mode = #tpu.pipeline_mode<synchronous>, transform_indices = @transform_3, window_bounds = array<i64: 128, 128>}, {pipeline_mode = #tpu.pipeline_mode<synchronous>, transform_indices = @transform_4, window_bounds = array<i64: 1, 128>}, {pipeline_mode = #tpu.pipeline_mode<synchronous>, transform_indices = @transform_5, window_bounds = array<i64: 128, 8>}, {pipeline_mode = #tpu.pipeline_mode<synchronous>, transform_indices = @transform_6, window_bounds = array<i64: 1, 8>}, {transform_indices = @transform_7, window_bounds = array<i64: 8, 8>}]} {
    %c0 = arith.constant 0 : index
    %c0_0 = arith.constant 0 : index
    %0 = vector.load %arg1[%c0, %c0_0] : memref<8x16xf32, #tpu.memory_space<vmem>>, vector<8x16xf32>
    %c0_1 = arith.constant 0 : index
    %c0_2 = arith.constant 0 : index
    %1 = vector.load %arg2[%c0_1, %c0_2] : memref<16x128xbf16, #tpu.memory_space<vmem>>, vector<16x128xbf16>
    %c0_3 = arith.constant 0 : index
    %c0_4 = arith.constant 0 : index
    %2 = vector.load %arg3[%c0_3, %c0_4] : memref<1x128xf32, #tpu.memory_space<vmem>>, vector<1x128xf32>
    %3 = arith.truncf %0 : vector<8x16xf32> to vector<8x16xbf16>
    %cst = arith.constant dense<0.000000e+00> : vector<8x128xf32>
    %4 = tpu.matmul %3, %1, %cst {dimension_numbers = #tpu.dot_dimension_numbers<[1], [0], [0], [1], [0, 0, 1, 1], [], []>} : vector<8x16xbf16>, vector<16x128xbf16>, vector<8x128xf32> -> vector<8x128xf32>
    %5 = vector.broadcast %2 : vector<1x128xf32> to vector<8x128xf32>
    %6 = arith.addf %4, %5 : vector<8x128xf32>
    %cst_5 = arith.constant 5.000000e-01 : f32
    %7 = vector.broadcast %cst_5 : f32 to vector<8x128xf32>
    %8 = arith.mulf %7, %6 : vector<8x128xf32>
    %cst_6 = arith.constant 0.707106769 : f32
    %9 = vector.broadcast %cst_6 : f32 to vector<8x128xf32>
    %10 = arith.mulf %6, %9 : vector<8x128xf32>
    %11 = math.erf %10 : vector<8x128xf32>
    %cst_7 = arith.constant 1.000000e+00 : f32
    %12 = vector.broadcast %cst_7 : f32 to vector<8x128xf32>
    %13 = arith.addf %12, %11 : vector<8x128xf32>
    %14 = arith.mulf %8, %13 : vector<8x128xf32>
    %c0_8 = arith.constant 0 : index
    %c0_9 = arith.constant 0 : index
    %15 = vector.load %arg4[%c0_8, %c0_9] : memref<128x128xbf16, #tpu.memory_space<vmem>>, vector<128x128xbf16>
    %c0_10 = arith.constant 0 : index
    %c0_11 = arith.constant 0 : index
    %16 = vector.load %arg5[%c0_10, %c0_11] : memref<1x128xf32, #tpu.memory_space<vmem>>, vector<1x128xf32>
    %17 = arith.truncf %14 : vector<8x128xf32> to vector<8x128xbf16>
    %cst_12 = arith.constant dense<0.000000e+00> : vector<8x128xf32>
    %18 = tpu.matmul %17, %15, %cst_12 {dimension_numbers = #tpu.dot_dimension_numbers<[1], [0], [0], [1], [0, 0, 1, 1], [], []>} : vector<8x128xbf16>, vector<128x128xbf16>, vector<8x128xf32> -> vector<8x128xf32>
    %19 = vector.broadcast %16 : vector<1x128xf32> to vector<8x128xf32>
    %20 = arith.addf %18, %19 : vector<8x128xf32>
    %cst_13 = arith.constant 5.000000e-01 : f32
    %21 = vector.broadcast %cst_13 : f32 to vector<8x128xf32>
    %22 = arith.mulf %21, %20 : vector<8x128xf32>
    %cst_14 = arith.constant 0.707106769 : f32
    %23 = vector.broadcast %cst_14 : f32 to vector<8x128xf32>
    %24 = arith.mulf %20, %23 : vector<8x128xf32>
    %25 = math.erf %24 : vector<8x128xf32>
    %cst_15 = arith.constant 1.000000e+00 : f32
    %26 = vector.broadcast %cst_15 : f32 to vector<8x128xf32>
    %27 = arith.addf %26, %25 : vector<8x128xf32>
    %28 = arith.mulf %22, %27 : vector<8x128xf32>
    %c0_16 = arith.constant 0 : index
    %c0_17 = arith.constant 0 : index
    %29 = vector.load %arg6[%c0_16, %c0_17] : memref<128x8xbf16, #tpu.memory_space<vmem>>, vector<128x8xbf16>
    %c0_18 = arith.constant 0 : index
    %c0_19 = arith.constant 0 : index
    %30 = vector.load %arg7[%c0_18, %c0_19] : memref<1x8xf32, #tpu.memory_space<vmem>>, vector<1x8xf32>
    %31 = arith.truncf %28 : vector<8x128xf32> to vector<8x128xbf16>
    %cst_20 = arith.constant dense<0.000000e+00> : vector<8x8xf32>
    %32 = tpu.matmul %31, %29, %cst_20 {dimension_numbers = #tpu.dot_dimension_numbers<[1], [0], [0], [1], [0, 0, 1, 1], [], []>} : vector<8x128xbf16>, vector<128x8xbf16>, vector<8x8xf32> -> vector<8x8xf32>
    %33 = vector.broadcast %30 : vector<1x8xf32> to vector<8x8xf32>
    %34 = arith.addf %32, %33 : vector<8x8xf32>
    %c0_21 = arith.constant 0 : index
    %c0_22 = arith.constant 0 : index
    %35 = vector.load %arg8[%c0_21, %c0_22] : memref<8x8xf32, #tpu.memory_space<vmem>>, vector<8x8xf32>
    tpu.vector_store %arg8[%c0_21, %c0_22], %34 {strides = array<i32>} : memref<8x8xf32, #tpu.memory_space<vmem>>, vector<8x8xf32>,
    return
  }
  func.func @transform_0(%arg0: i32) -> (i32, i32) {
    %c0_i32 = arith.constant 0 : i32
    %c0_i32_0 = arith.constant 0 : i32
    return %arg0, %c0_i32 : i32, i32
  }
  func.func @transform_1(%arg0: i32) -> (i32, i32) {
    %c0_i32 = arith.constant 0 : i32
    %c0_i32_0 = arith.constant 0 : i32
    %c0_i32_1 = arith.constant 0 : i32
    return %c0_i32, %c0_i32_0 : i32, i32
  }
  func.func @transform_2(%arg0: i32) -> (i32, i32) {
    %c0_i32 = arith.constant 0 : i32
    %c0_i32_0 = arith.constant 0 : i32
    %c0_i32_1 = arith.constant 0 : i32
    return %c0_i32, %c0_i32_0 : i32, i32
  }
  func.func @transform_3(%arg0: i32) -> (i32, i32) {
    %c0_i32 = arith.constant 0 : i32
    %c0_i32_0 = arith.constant 0 : i32
    %c0_i32_1 = arith.constant 0 : i32
    return %c0_i32, %c0_i32_0 : i32, i32
  }
  func.func @transform_4(%arg0: i32) -> (i32, i32) {
    %c0_i32 = arith.constant 0 : i32
    %c0_i32_0 = arith.constant 0 : i32
    %c0_i32_1 = arith.constant 0 : i32
    return %c0_i32, %c0_i32_0 : i32, i32
  }
  func.func @transform_5(%arg0: i32) -> (i32, i32) {
    %c0_i32 = arith.constant 0 : i32
    %c0_i32_0 = arith.constant 0 : i32
    %c0_i32_1 = arith.constant 0 : i32
    return %c0_i32, %c0_i32_0 : i32, i32
  }
  func.func @transform_6(%arg0: i32) -> (i32, i32) {
    %c0_i32 = arith.constant 0 : i32
    %c0_i32_0 = arith.constant 0 : i32
    %c0_i32_1 = arith.constant 0 : i32
    return %c0_i32, %c0_i32_0 : i32, i32
  }
  func.func @transform_7(%arg0: i32) -> (i32, i32) {
    %c0_i32 = arith.constant 0 : i32
    %c0_i32_0 = arith.constant 0 : i32
    return %arg0, %c0_i32 : i32, i32
  }
}

module attributes {stable_mosaic.version = 11 : i64} {
  func.func @_mlp_fused_kernel(%arg0: i32, %arg1: memref<8x16xf32, #tpu.memory_space<vmem>>, %arg2: memref<16x128xbf16, #tpu.memory_space<vmem>>, %arg3: memref<1x128xf32, #tpu.memory_space<vmem>>, %arg4: memref<128x128xbf16, #tpu.memory_space<vmem>>, %arg5: memref<1x128xf32, #tpu.memory_space<vmem>>, %arg6: memref<128x8xbf16, #tpu.memory_space<vmem>>, %arg7: memref<1x8xf32, #tpu.memory_space<vmem>>, %arg8: memref<8x8xf32, #tpu.memory_space<vmem>>) attributes {dimension_semantics = [#tpu.dimension_semantics<parallel>], iteration_bounds = array<i64: 1>, scalar_prefetch = 0 : i64, scratch_operands = 0 : i64, tpu.core_type = #tpu.core_type<tc>, window_params = [{transform_indices = @transform_0, window_bounds = array<i64: 8, 16>}, {pipeline_mode = #tpu.pipeline_mode<synchronous>, transform_indices = @transform_1, window_bounds = array<i64: 16, 128>}, {pipeline_mode = #tpu.pipeline_mode<synchronous>, transform_indices = @transform_2, window_bounds = array<i64: 1, 128>}, {pipeline_mode = #tpu.pipeline_mode<synchronous>, transform_indices = @transform_3, window_bounds = array<i64: 128, 128>}, {pipeline_mode = #tpu.pipeline_mode<synchronous>, transform_indices = @transform_4, window_bounds = array<i64: 1, 128>}, {pipeline_mode = #tpu.pipeline_mode<synchronous>, transform_indices = @transform_5, window_bounds = array<i64: 128, 8>}, {pipeline_mode = #tpu.pipeline_mode<synchronous>, transform_indices = @transform_6, window_bounds = array<i64: 1, 8>}, {transform_indices = @transform_7, window_bounds = array<i64: 8, 8>}]} {
    %c0 = arith.constant 0 : index
    %c0_0 = arith.constant 0 : index
    %0 = vector.load %arg1[%c0, %c0_0] : memref<8x16xf32, #tpu.memory_space<vmem>>, vector<8x16xf32>
    %c0_1 = arith.constant 0 : index
    %c0_2 = arith.constant 0 : index
    %1 = vector.load %arg2[%c0_1, %c0_2] : memref<16x128xbf16, #tpu.memory_space<vmem>>, vector<16x128xbf16>
    %c0_3 = arith.constant 0 : index
    %c0_4 = arith.constant 0 : index
    %2 = vector.load %arg3[%c0_3, %c0_4] : memref<1x128xf32, #tpu.memory_space<vmem>>, vector<1x128xf32>
    %3 = arith.truncf %0 : vector<8x16xf32> to vector<8x16xbf16>
    %cst = arith.constant dense<0.000000e+00> : vector<8x128xf32>
    %4 = tpu.matmul %3, %1, %cst {dimension_numbers = #tpu.dot_dimension_numbers<[1], [0], [0], [1], [0, 0, 1, 1], [], []>} : vector<8x16xbf16>, vector<16x128xbf16>, vector<8x128xf32> -> vector<8x128xf32>
    %5 = vector.broadcast %2 : vector<1x128xf32> to vector<8x128xf32>
    %6 = arith.addf %4, %5 : vector<8x128xf32>
    %cst_5 = arith.constant 5.000000e-01 : f32
    %7 = vector.broadcast %cst_5 : f32 to vector<8x128xf32>
    %8 = arith.mulf %7, %6 : vector<8x128xf32>
    %cst_6 = arith.constant 0.707106769 : f32
    %9 = vector.broadcast %cst_6 : f32 to vector<8x128xf32>
    %10 = arith.mulf %6, %9 : vector<8x128xf32>
    %11 = math.erf %10 : vector<8x128xf32>
    %cst_7 = arith.constant 1.000000e+00 : f32
    %12 = vector.broadcast %cst_7 : f32 to vector<8x128xf32>
    %13 = arith.addf %12, %11 : vector<8x128xf32>
    %14 = arith.mulf %8, %13 : vector<8x128xf32>
    %c0_8 = arith.constant 0 : index
    %c0_9 = arith.constant 0 : index
    %15 = vector.load %arg4[%c0_8, %c0_9] : memref<128x128xbf16, #tpu.memory_space<vmem>>, vector<128x128xbf16>
    %c0_10 = arith.constant 0 : index
    %c0_11 = arith.constant 0 : index
    %16 = vector.load %arg5[%c0_10, %c0_11] : memref<1x128xf32, #tpu.memory_space<vmem>>, vector<1x128xf32>
    %17 = arith.truncf %14 : vector<8x128xf32> to vector<8x128xbf16>
    %cst_12 = arith.constant dense<0.000000e+00> : vector<8x128xf32>
    %18 = tpu.matmul %17, %15, %cst_12 {dimension_numbers = #tpu.dot_dimension_numbers<[1], [0], [0], [1], [0, 0, 1, 1], [], []>} : vector<8x128xbf16>, vector<128x128xbf16>, vector<8x128xf32> -> vector<8x128xf32>
    %19 = vector.broadcast %16 : vector<1x128xf32> to vector<8x128xf32>
    %20 = arith.addf %18, %19 : vector<8x128xf32>
    %cst_13 = arith.constant 5.000000e-01 : f32
    %21 = vector.broadcast %cst_13 : f32 to vector<8x128xf32>
    %22 = arith.mulf %21, %20 : vector<8x128xf32>
    %cst_14 = arith.constant 0.707106769 : f32
    %23 = vector.broadcast %cst_14 : f32 to vector<8x128xf32>
    %24 = arith.mulf %20, %23 : vector<8x128xf32>
    %25 = math.erf %24 : vector<8x128xf32>
    %cst_15 = arith.constant 1.000000e+00 : f32
    %26 = vector.broadcast %cst_15 : f32 to vector<8x128xf32>
    %27 = arith.addf %26, %25 : vector<8x128xf32>
    %28 = arith.mulf %22, %27 : vector<8x128xf32>
    %c0_16 = arith.constant 0 : index
    %c0_17 = arith.constant 0 : index
    %29 = vector.load %arg6[%c0_16, %c0_17] : memref<128x8xbf16, #tpu.memory_space<vmem>>, vector<128x8xbf16>
    %c0_18 = arith.constant 0 : index
    %c0_19 = arith.constant 0 : index
    %30 = vector.load %arg7[%c0_18, %c0_19] : memref<1x8xf32, #tpu.memory_space<vmem>>, vector<1x8xf32>
    %31 = arith.truncf %28 : vector<8x128xf32> to vector<8x128xbf16>
    %cst_20 = arith.constant dense<0.000000e+00> : vector<8x8xf32>
    %32 = tpu.matmul %31, %29, %cst_20 {dimension_numbers = #tpu.dot_dimension_numbers<[1], [0], [0], [1], [0, 0, 1, 1], [], []>} : vector<8x128xbf16>, vector<128x8xbf16>, vector<8x8xf32> -> vector<8x8xf32>
    %33 = vector.broadcast %30 : vector<1x8xf32> to vector<8x8xf32>
    %34 = arith.addf %32, %33 : vector<8x8xf32>
    %c0_21 = arith.constant 0 : index
    %c0_22 = arith.constant 0 : index
    %35 = vector.load %arg8[%c0_21, %c0_22] : memref<8x8xf32, #tpu.memory_space<vmem>>, vector<8x8xf32>
    tpu.vector_store %arg8[%c0_21, %c0_22], %34 {strides = array<i32>} : memref<8x8xf32, #tpu.memory_space<vmem>>, vector<8x8xf32>,
    return
  }
  func.func @transform_0(%arg0: i32) -> (i32, i32) {
    %c0_i32 = arith.constant 0 : i32
    %c0_i32_0 = arith.constant 0 : i32
    return %arg0, %c0_i32 : i32, i32
  }
  func.func @transform_1(%arg0: i32) -> (i32, i32) {
    %c0_i32 = arith.constant 0 : i32
    %c0_i32_0 = arith.constant 0 : i32
    %c0_i32_1 = arith.constant 0 : i32
    return %c0_i32, %c0_i32_0 : i32, i32
  }
  func.func @transform_2(%arg0: i32) -> (i32, i32) {
    %c0_i32 = arith.constant 0 : i32
    %c0_i32_0 = arith.constant 0 : i32
    %c0_i32_1 = arith.constant 0 : i32
    return %c0_i32, %c0_i32_0 : i32, i32
  }
  func.func @transform_3(%arg0: i32) -> (i32, i32) {
    %c0_i32 = arith.constant 0 : i32
    %c0_i32_0 = arith.constant 0 : i32
    %c0_i32_1 = arith.constant 0 : i32
    return %c0_i32, %c0_i32_0 : i32, i32
  }
  func.func @transform_4(%arg0: i32) -> (i32, i32) {
    %c0_i32 = arith.constant 0 : i32
    %c0_i32_0 = arith.constant 0 : i32
    %c0_i32_1 = arith.constant 0 : i32
    return %c0_i32, %c0_i32_0 : i32, i32
  }
  func.func @transform_5(%arg0: i32) -> (i32, i32) {
    %c0_i32 = arith.constant 0 : i32
    %c0_i32_0 = arith.constant 0 : i32
    %c0_i32_1 = arith.constant 0 : i32
    return %c0_i32, %c0_i32_0 : i32, i32
  }
  func.func @transform_6(%arg0: i32) -> (i32, i32) {
    %c0_i32 = arith.constant 0 : i32
    %c0_i32_0 = arith.constant 0 : i32
    %c0_i32_1 = arith.constant 0 : i32
    return %c0_i32, %c0_i32_0 : i32, i32
  }
  func.func @transform_7(%arg0: i32) -> (i32, i32) {
    %c0_i32 = arith.constant 0 : i32
    %c0_i32_0 = arith.constant 0 : i32
    return %arg0, %c0_i32 : i32, i32
  }
}

</mosaic_0001>

<llo_original>
// kernel: tpu_custom_call.1
$region0: #{tpu_custom_call.1}
  #allocation0 [shape = 'u32[]', space=smem, size = 0x4, offset = 0x4, fixed_abs, tag = 'smem constant byte address 0x4 - core index']
  #allocation1 [shape = 'u32[144,128]{1,0:T(1,128)}', space=vmem, size = 0x12000, scoped, tag = 'internal scratch']
  %s0 = inlined_call_operand.vmem [shape: f32[8,16], index: 0, kind: input, shape index: {}]
  %s1 = inlined_call_operand.hbm [shape: bf16[16,128], index: 1, kind: input, shape index: {}]
  %s2 = inlined_call_operand.vmem [shape: f32[1,128], index: 2, kind: input, shape index: {}]
  %s3 = inlined_call_operand.vmem [shape: bf16[128,128], index: 3, kind: input, shape index: {}]
  %s4 = inlined_call_operand.vmem [shape: f32[1,128], index: 4, kind: input, shape index: {}]
  %s5 = inlined_call_operand.vmem [shape: bf16[128,8], index: 5, kind: input, shape index: {}]
  %s6 = inlined_call_operand.vmem [shape: f32[1,8], index: 6, kind: input, shape index: {}]
  %s7 = inlined_call_operand.hbm [shape: f32[8,8], index: 7, kind: output, shape index: {}]
  %s8 = sld [smem:[#allocation0]]
  $region42: #{tpu_custom_call.1} parent=0
    _
  %s10 = ssub.s32 1, %s8
  %s11 = scalar_select 0, %s10, %s8
  $region1: #{tpu_custom_call.1} parent=0
    #allocation2 [shape = 'u8[4096]{0}', space=vmem, size = 0x1000, scoped, tag = 'input window, operand 1, single buffered']
    #allocation3 [shape = 's32[1]{0}', space=sflag, size = 0x4, scoped, tag = 'scoped memory for tpu_custom_call.1']
    #allocation4 [shape = 's32[1]{0}', space=sflag, size = 0x4, scoped, tag = 'scoped memory for tpu_custom_call.1']
    #allocation5 [shape = 'u8[4096]{0}', space=vmem, size = 0x1000, scoped, tag = 'output window, operand 0, single buffered']
    %12 = vsyncpa [#allocation3], 0
    %13 = vsyncpa [#allocation4], 0
    // Predicated region
    $region2: #{tpu_custom_call.1} parent=1 // pred_check
      _
    $region3: #{tpu_custom_call.1} parent=1 // pred_check_branch
      %15 = sbr.rel (0) target = $region5
    $region4: #{tpu_custom_call.1} parent=1 // pred_region
      _
    $region5: #{tpu_custom_call.1} parent=1 // pred_fallthru
      _
    // Predicated region
    $region6: #{tpu_custom_call.1} parent=1 // pred_check
      _
    $region7: #{tpu_custom_call.1} parent=1 // pred_check_branch
      %17 = sbr.rel (0) target = $region9
    $region8: #{tpu_custom_call.1} parent=1 // pred_region
      %s19 = ssub.s32 128, 128
      %20 = vsyncadd [#allocation3], %s19
      %s21 = sshll.u32 [#allocation2], 4
      %s22 = int_to_ptr.vmem [resolvable:$true] %s21
      %27 = dma.hbm_to_vmem [thread:$0]  %s1, 128, %s22, [#allocation3], 64, 64, 4
    $region9: #{tpu_custom_call.1} parent=1 // pred_fallthru
      _
    // Predicated region
    $region10: #{tpu_custom_call.1} parent=1 // pred_check
      _
    $region11: #{tpu_custom_call.1} parent=1 // pred_check_branch
      %29 = sbr.rel (0) target = $region13
    $region12: #{tpu_custom_call.1} parent=1 // pred_region
      _
    $region13: #{tpu_custom_call.1} parent=1 // pred_fallthru
      _
    // Predicated region
    $region14: #{tpu_custom_call.1} parent=1 // pred_check
      _
    $region15: #{tpu_custom_call.1} parent=1 // pred_check_branch
      %31 = sbr.rel (0) target = $region17
    $region16: #{tpu_custom_call.1} parent=1 // pred_region
      _
    $region17: #{tpu_custom_call.1} parent=1 // pred_fallthru
      _
    // Predicated region
    $region18: #{tpu_custom_call.1} parent=1 // pred_check
      _
    $region19: #{tpu_custom_call.1} parent=1 // pred_check_branch
      %33 = sbr.rel (0) target = $region21
    $region20: #{tpu_custom_call.1} parent=1 // pred_region
      _
    $region21: #{tpu_custom_call.1} parent=1 // pred_fallthru
      _
    // Predicated region
    $region22: #{tpu_custom_call.1} parent=1 // pred_check
      _
    $region23: #{tpu_custom_call.1} parent=1 // pred_check_branch
      %35 = sbr.rel (0) target = $region25
    $region24: #{tpu_custom_call.1} parent=1 // pred_region
      _
    $region25: #{tpu_custom_call.1} parent=1 // pred_fallthru
      _
    // Predicated region
    $region26: #{tpu_custom_call.1} parent=1 // pred_check
      _
    $region27: #{tpu_custom_call.1} parent=1 // pred_check_branch
      %37 = sbr.rel (0) target = $region29
    $region28: #{tpu_custom_call.1} parent=1 // pred_region
      _
    $region29: #{tpu_custom_call.1} parent=1 // pred_fallthru
      _
    // Predicated region
    $region30: #{tpu_custom_call.1} parent=1 // pred_check
      _
    $region31: #{tpu_custom_call.1} parent=1 // pred_check_branch
      %39 = sbr.rel (0) target = $region33
    $region32: #{tpu_custom_call.1} parent=1 // pred_region
      %40 = dma.done [#allocation3], 128
    $region33: #{tpu_custom_call.1} parent=1 // pred_fallthru
      _
    %v42 = vld [vmem:[%s0] sm:$0xff]
    %v43 = vld [vmem:[#allocation2] sm:$0xf]
    %v44 = vld [vmem:[#allocation2 + $0x4] sm:$0xf]
    %v45 = vld [vmem:[%s2] sm:$0x1]
    %v46 = vpack.c.bf16 %v42, %v42
    %v48 = vlaneseq
    %v49 = vshrl.u32 %v48, 7
    %v50 = vsub.s32 0, %v49
    %v51 = vrot.slane %v45, %v50
    %v55 = vunpack.c.l.b16 %v43
    %v56 = vunpack.c.l.b16 %v44
    %v57 = vpack.c.b16 %v56, %v55
    %vm59 = vcmask 130048
    %v61 = vsel %vm59, %v46, 0
    %63 = vmatprep.subr.bf16.mxu0 0
    %64 = vmatpush1.bf16.msra.mxu0 %v57
    %65 = vmatprep.subr.bf16.mxu0 0
    %66 = vmatpush1.bf16.msra.mxu0 0
    %67 = vmatprep.subr.bf16.mxu0 0
    %68 = vmatpush1.bf16.msra.mxu0 0
    %69 = vmatprep.subr.bf16.mxu0 0
    %70 = vmatpush1.bf16.msra.mxu0 0
    %71 = vmatprep.subr.bf16.mxu0 0
    %72 = vmatpush1.bf16.msra.mxu0 0
    %73 = vmatprep.subr.bf16.mxu0 0
    %74 = vmatpush1.bf16.msra.mxu0 0
    %75 = vmatprep.subr.bf16.mxu0 0
    %76 = vmatpush1.bf16.msra.mxu0 0
    %77 = vmatprep.subr.bf16.mxu0 0
    %78 = vmatpush1.bf16.msra.mxu0 0
    %79 = vmatprep.subr.bf16.mxu0 0
    %80 = vmatpush1.bf16.msra.mxu0 0
    %81 = vmatprep.subr.bf16.mxu0 0
    %82 = vmatpush1.bf16.msra.mxu0 0
    %83 = vmatprep.subr.bf16.mxu0 0
    %84 = vmatpush1.bf16.msra.mxu0 0
    %85 = vmatprep.subr.bf16.mxu0 0
    %86 = vmatpush1.bf16.msra.mxu0 0
    %87 = vmatprep.subr.bf16.mxu0 0
    %88 = vmatpush1.bf16.msra.mxu0 0
    %89 = vmatprep.subr.bf16.mxu0 0
    %90 = vmatpush1.bf16.msra.mxu0 0
    %91 = vmatprep.subr.bf16.mxu0 0
    %92 = vmatpush1.bf16.msra.mxu0 0
    %93 = vmatprep.subr.bf16.mxu0 0
    %94 = vmatpush1.bf16.msra.mxu0 0
    %95 = vmatprep.mubr.bf16.mxu0 0
    %96 = vmatmul.mubr.bf16.gmra.mrb[0].mxu0 %v61
    %v97 = vpop.f32.mrb[0].mxu0
    %v98 = vadd.f32 %v51, %v97
    %v99 = vpop.f32.mrb[0].mxu0
    %v100 = vpop.f32.mrb[0].mxu0
    %v101 = vpop.f32.mrb[0].mxu0
    %102 = vdwg.mxu0
    %v103 = vmul.f32 %v98, 0.5
    %v104 = vmul.f32 %v98, 0.70710677
    %v105 = verf.f32.pop %v104
    %v106 = vadd.f32 %v105, 1.0
    %v107 = vmul.f32 %v103, %v106
    %v108 = vld [vmem:[%s3] sm:$0xf]
    %v109 = vld [vmem:[%s3 + $0x4] sm:$0xf]
    %v110 = vld [vmem:[%s3 + $0x8] sm:$0xf]
    %v111 = vld [vmem:[%s3 + $0xc] sm:$0xf]
    %v112 = vld [vmem:[%s3 + $0x10] sm:$0xf]
    %v113 = vld [vmem:[%s3 + $0x14] sm:$0xf]
    %v114 = vld [vmem:[%s3 + $0x18] sm:$0xf]
    %v115 = vld [vmem:[%s3 + $0x1c] sm:$0xf]
    %v116 = vld [vmem:[%s3 + $0x20] sm:$0xf]
    %v117 = vld [vmem:[%s3 + $0x24] sm:$0xf]
    %v118 = vld [vmem:[%s3 + $0x28] sm:$0xf]
    %v119 = vld [vmem:[%s3 + $0x2c] sm:$0xf]
    %v120 = vld [vmem:[%s3 + $0x30] sm:$0xf]
    %v121 = vld [vmem:[%s3 + $0x34] sm:$0xf]
    %v122 = vld [vmem:[%s3 + $0x38] sm:$0xf]
    %v123 = vld [vmem:[%s3 + $0x3c] sm:$0xf]
    %v124 = vld [vmem:[%s4] sm:$0x1]
    %v125 = vpack.c.bf16 %v107, %v107
    %v127 = vlaneseq
    %v128 = vshrl.u32 %v127, 7
    %v129 = vsub.s32 0, %v128
    %v130 = vrot.slane %v124, %v129
    %v148 = vunpack.c.l.b16 %v108
    %v149 = vunpack.c.l.b16 %v109
    %v150 = vunpack.c.l.b16 %v110
    %v151 = vunpack.c.l.b16 %v111
    %v152 = vunpack.c.l.b16 %v112
    %v153 = vunpack.c.l.b16 %v113
    %v154 = vunpack.c.l.b16 %v114
    %v155 = vunpack.c.l.b16 %v115
    %v156 = vunpack.c.l.b16 %v116
    %v157 = vunpack.c.l.b16 %v117
    %v158 = vunpack.c.l.b16 %v118
    %v159 = vunpack.c.l.b16 %v119
    %v160 = vunpack.c.l.b16 %v120
    %v161 = vunpack.c.l.b16 %v121
    %v162 = vunpack.c.l.b16 %v122
    %v163 = vunpack.c.l.b16 %v123
    %v164 = vpack.c.b16 %v149, %v148
    %v165 = vpack.c.b16 %v151, %v150
    %v166 = vpack.c.b16 %v153, %v152
    %v167 = vpack.c.b16 %v155, %v154
    %v168 = vpack.c.b16 %v157, %v156
    %v169 = vpack.c.b16 %v159, %v158
    %v170 = vpack.c.b16 %v161, %v160
    %v171 = vpack.c.b16 %v163, %v162
    %180 = vmatprep.subr.bf16.mxu0 0
    %181 = vmatpush1.bf16.msra.mxu0 %v164
    %182 = vmatprep.subr.bf16.mxu0 0
    %183 = vmatpush1.bf16.msra.mxu0 %v165
    %184 = vmatprep.subr.bf16.mxu0 0
    %185 = vmatpush1.bf16.msra.mxu0 %v166
    %186 = vmatprep.subr.bf16.mxu0 0
    %187 = vmatpush1.bf16.msra.mxu0 %v167
    %188 = vmatprep.subr.bf16.mxu0 0
    %189 = vmatpush1.bf16.msra.mxu0 %v168
    %190 = vmatprep.subr.bf16.mxu0 0
    %191 = vmatpush1.bf16.msra.mxu0 %v169
    %192 = vmatprep.subr.bf16.mxu0 0
    %193 = vmatpush1.bf16.msra.mxu0 %v170
    %194 = vmatprep.subr.bf16.mxu0 0
    %195 = vmatpush1.bf16.msra.mxu0 %v171
    %196 = vmatprep.subr.bf16.mxu0 0
    %197 = vmatpush1.bf16.msra.mxu0 0
    %198 = vmatprep.subr.bf16.mxu0 0
    %199 = vmatpush1.bf16.msra.mxu0 0
    %200 = vmatprep.subr.bf16.mxu0 0
    %201 = vmatpush1.bf16.msra.mxu0 0
    %202 = vmatprep.subr.bf16.mxu0 0
    %203 = vmatpush1.bf16.msra.mxu0 0
    %204 = vmatprep.subr.bf16.mxu0 0
    %205 = vmatpush1.bf16.msra.mxu0 0
    %206 = vmatprep.subr.bf16.mxu0 0
    %207 = vmatpush1.bf16.msra.mxu0 0
    %208 = vmatprep.subr.bf16.mxu0 0
    %209 = vmatpush1.bf16.msra.mxu0 0
    %210 = vmatprep.subr.bf16.mxu0 0
    %211 = vmatpush1.bf16.msra.mxu0 0
    %212 = vmatprep.mubr.bf16.mxu0 0
    %213 = vmatmul.mubr.bf16.gmra.mrb[0].mxu0 %v125
    %v214 = vpop.f32.mrb[0].mxu0
    %v215 = vadd.f32 %v130, %v214
    %v216 = vpop.f32.mrb[0].mxu0
    %v217 = vpop.f32.mrb[0].mxu0
    %v218 = vpop.f32.mrb[0].mxu0
    %219 = vdwg.mxu0
    %v220 = vmul.f32 %v215, 0.5
    %v221 = vmul.f32 %v215, 0.70710677
    %v222 = verf.f32.pop %v221
    %v223 = vadd.f32 %v222, 1.0
    %v224 = vmul.f32 %v220, %v223
    %v225 = vld [vmem:[%s5] sm:$0xf]
    %v226 = vld [vmem:[%s5 + $0x4] sm:$0xf]
    %v227 = vld [vmem:[%s5 + $0x8] sm:$0xf]
    %v228 = vld [vmem:[%s5 + $0xc] sm:$0xf]
    %v229 = vld [vmem:[%s5 + $0x10] sm:$0xf]
    %v230 = vld [vmem:[%s5 + $0x14] sm:$0xf]
    %v231 = vld [vmem:[%s5 + $0x18] sm:$0xf]
    %v232 = vld [vmem:[%s5 + $0x1c] sm:$0xf]
    %v233 = vld [vmem:[%s5 + $0x20] sm:$0xf]
    %v234 = vld [vmem:[%s5 + $0x24] sm:$0xf]
    %v235 = vld [vmem:[%s5 + $0x28] sm:$0xf]
    %v236 = vld [vmem:[%s5 + $0x2c] sm:$0xf]
    %v237 = vld [vmem:[%s5 + $0x30] sm:$0xf]
    %v238 = vld [vmem:[%s5 + $0x34] sm:$0xf]
    %v239 = vld [vmem:[%s5 + $0x38] sm:$0xf]
    %v240 = vld [vmem:[%s5 + $0x3c] sm:$0xf]
    %v241 = vld [vmem:[%s6] sm:$0x1]
    %v242 = vpack.c.bf16 %v224, %v224
    %v244 = vlaneseq
    %v245 = vshrl.u32 %v244, 7
    %v246 = vsub.s32 0, %v245
    %v247 = vrot.slane %v241, %v246
    %v265 = vunpack.c.l.b16 %v225
    %v266 = vunpack.c.l.b16 %v226
    %v267 = vunpack.c.l.b16 %v227
    %v268 = vunpack.c.l.b16 %v228
    %v269 = vunpack.c.l.b16 %v229
    %v270 = vunpack.c.l.b16 %v230
    %v271 = vunpack.c.l.b16 %v231
    %v272 = vunpack.c.l.b16 %v232
    %v273 = vunpack.c.l.b16 %v233
    %v274 = vunpack.c.l.b16 %v234
    %v275 = vunpack.c.l.b16 %v235
    %v276 = vunpack.c.l.b16 %v236
    %v277 = vunpack.c.l.b16 %v237
    %v278 = vunpack.c.l.b16 %v238
    %v279 = vunpack.c.l.b16 %v239
    %v280 = vunpack.c.l.b16 %v240
    %v281 = vpack.c.b16 %v266, %v265
    %v282 = vpack.c.b16 %v268, %v267
    %v283 = vpack.c.b16 %v270, %v269
    %v284 = vpack.c.b16 %v272, %v271
    %v285 = vpack.c.b16 %v274, %v273
    %v286 = vpack.c.b16 %v276, %v275
    %v287 = vpack.c.b16 %v278, %v277
    %v288 = vpack.c.b16 %v280, %v279
    %297 = vmatprep.subr.bf16.mxu0 0
    %298 = vmatpush1.bf16.msra.mxu0 %v281
    %299 = vmatprep.subr.bf16.mxu0 0
    %300 = vmatpush1.bf16.msra.mxu0 %v282
    %301 = vmatprep.subr.bf16.mxu0 0
    %302 = vmatpush1.bf16.msra.mxu0 %v283
    %303 = vmatprep.subr.bf16.mxu0 0
    %304 = vmatpush1.bf16.msra.mxu0 %v284
    %305 = vmatprep.subr.bf16.mxu0 0
    %306 = vmatpush1.bf16.msra.mxu0 %v285
    %307 = vmatprep.subr.bf16.mxu0 0
    %308 = vmatpush1.bf16.msra.mxu0 %v286
    %309 = vmatprep.subr.bf16.mxu0 0
    %310 = vmatpush1.bf16.msra.mxu0 %v287
    %311 = vmatprep.subr.bf16.mxu0 0
    %312 = vmatpush1.bf16.msra.mxu0 %v288
    %313 = vmatprep.subr.bf16.mxu0 0
    %314 = vmatpush1.bf16.msra.mxu0 0
    %315 = vmatprep.subr.bf16.mxu0 0
    %316 = vmatpush1.bf16.msra.mxu0 0
    %317 = vmatprep.subr.bf16.mxu0 0
    %318 = vmatpush1.bf16.msra.mxu0 0
    %319 = vmatprep.subr.bf16.mxu0 0
    %320 = vmatpush1.bf16.msra.mxu0 0
    %321 = vmatprep.subr.bf16.mxu0 0
    %322 = vmatpush1.bf16.msra.mxu0 0
    %323 = vmatprep.subr.bf16.mxu0 0
    %324 = vmatpush1.bf16.msra.mxu0 0
    %325 = vmatprep.subr.bf16.mxu0 0
    %326 = vmatpush1.bf16.msra.mxu0 0
    %327 = vmatprep.subr.bf16.mxu0 0
    %328 = vmatpush1.bf16.msra.mxu0 0
    %329 = vmatprep.mubr.bf16.mxu0 0
    %330 = vmatmul.mubr.bf16.gmra.mrb[0].mxu0 %v242
    %v331 = vpop.f32.mrb[0].mxu0
    %v332 = vadd.f32 %v247, %v331
    %v333 = vpop.f32.mrb[0].mxu0
    %v334 = vpop.f32.mrb[0].mxu0
    %v335 = vpop.f32.mrb[0].mxu0
    %336 = vdwg.mxu0
    %vm337 = vcmask 64512
    %338 = vst.msk [vmem:[#allocation5] sm:$0xff] %vm337, %v332
    // Predicated region
    $region34: #{tpu_custom_call.1} parent=1 // pred_check
      _
    $region35: #{tpu_custom_call.1} parent=1 // pred_check_branch
      %340 = sbr.rel (0) target = $region37
    $region36: #{tpu_custom_call.1} parent=1 // pred_region
      %s342 = ssub.s32 128, 128
      %343 = vsyncadd [#allocation4], %s342
      %s345 = sshll.u32 [#allocation5], 4
      %s346 = int_to_ptr.vmem [resolvable:$true] %s345
      %348 = dma.vmem_to_hbm [thread:$0]  %s346, 128, %s7, [#allocation4]
    $region37: #{tpu_custom_call.1} parent=1 // pred_fallthru
      _
    // Predicated region
    $region38: #{tpu_custom_call.1} parent=1 // pred_check
      _
    $region39: #{tpu_custom_call.1} parent=1 // pred_check_branch
      %350 = sbr.rel (0) target = $region41
    $region40: #{tpu_custom_call.1} parent=1 // pred_region
      %351 = dma.done [#allocation4], 128
    $region41: #{tpu_custom_call.1} parent=1 // pred_fallthru
      _
    %352 = vsyncpa [#allocation3], 1
    %353 = vsyncpa [#allocation4], 1

// kernel: tpu_custom_call.1
$region0: #{tpu_custom_call.1}
  #allocation0 [shape = 'u32[]', space=smem, size = 0x4, offset = 0x4, fixed_abs, tag = 'smem constant byte address 0x4 - core index']
  #allocation1 [shape = 'u32[144,128]{1,0:T(1,128)}', space=vmem, size = 0x12000, scoped, tag = 'internal scratch']
  %s0 = inlined_call_operand.vmem [shape: f32[8,16], index: 0, kind: input, shape index: {}]
  %s1 = inlined_call_operand.hbm [shape: bf16[16,128], index: 1, kind: input, shape index: {}]
  %s2 = inlined_call_operand.vmem [shape: f32[1,128], index: 2, kind: input, shape index: {}]
  %s3 = inlined_call_operand.vmem [shape: bf16[128,128], index: 3, kind: input, shape index: {}]
  %s4 = inlined_call_operand.vmem [shape: f32[1,128], index: 4, kind: input, shape index: {}]
  %s5 = inlined_call_operand.vmem [shape: bf16[128,8], index: 5, kind: input, shape index: {}]
  %s6 = inlined_call_operand.vmem [shape: f32[1,8], index: 6, kind: input, shape index: {}]
  %s7 = inlined_call_operand.hbm [shape: f32[8,8], index: 7, kind: output, shape index: {}]
  %s8 = sld [smem:[#allocation0]]
  $region42: #{tpu_custom_call.1} parent=0
    _
  %s10 = ssub.s32 1, %s8
  %s11 = scalar_select 0, %s10, %s8
  $region1: #{tpu_custom_call.1} parent=0
    #allocation2 [shape = 'u8[4096]{0}', space=vmem, size = 0x1000, scoped, tag = 'input window, operand 1, single buffered']
    #allocation3 [shape = 's32[1]{0}', space=sflag, size = 0x4, scoped, tag = 'scoped memory for tpu_custom_call.1']
    #allocation4 [shape = 's32[1]{0}', space=sflag, size = 0x4, scoped, tag = 'scoped memory for tpu_custom_call.1']
    #allocation5 [shape = 'u8[4096]{0}', space=vmem, size = 0x1000, scoped, tag = 'output window, operand 0, single buffered']
    %12 = vsyncpa [#allocation3], 0
    %13 = vsyncpa [#allocation4], 0
    // Predicated region
    $region2: #{tpu_custom_call.1} parent=1 // pred_check
      _
    $region3: #{tpu_custom_call.1} parent=1 // pred_check_branch
      %15 = sbr.rel (0) target = $region5
    $region4: #{tpu_custom_call.1} parent=1 // pred_region
      _
    $region5: #{tpu_custom_call.1} parent=1 // pred_fallthru
      _
    // Predicated region
    $region6: #{tpu_custom_call.1} parent=1 // pred_check
      _
    $region7: #{tpu_custom_call.1} parent=1 // pred_check_branch
      %17 = sbr.rel (0) target = $region9
    $region8: #{tpu_custom_call.1} parent=1 // pred_region
      %s19 = ssub.s32 128, 128
      %20 = vsyncadd [#allocation3], %s19
      %s21 = sshll.u32 [#allocation2], 4
      %s22 = int_to_ptr.vmem [resolvable:$true] %s21
      %27 = dma.hbm_to_vmem [thread:$0]  %s1, 128, %s22, [#allocation3], 64, 64, 4
    $region9: #{tpu_custom_call.1} parent=1 // pred_fallthru
      _
    // Predicated region
    $region10: #{tpu_custom_call.1} parent=1 // pred_check
      _
    $region11: #{tpu_custom_call.1} parent=1 // pred_check_branch
      %29 = sbr.rel (0) target = $region13
    $region12: #{tpu_custom_call.1} parent=1 // pred_region
      _
    $region13: #{tpu_custom_call.1} parent=1 // pred_fallthru
      _
    // Predicated region
    $region14: #{tpu_custom_call.1} parent=1 // pred_check
      _
    $region15: #{tpu_custom_call.1} parent=1 // pred_check_branch
      %31 = sbr.rel (0) target = $region17
    $region16: #{tpu_custom_call.1} parent=1 // pred_region
      _
    $region17: #{tpu_custom_call.1} parent=1 // pred_fallthru
      _
    // Predicated region
    $region18: #{tpu_custom_call.1} parent=1 // pred_check
      _
    $region19: #{tpu_custom_call.1} parent=1 // pred_check_branch
      %33 = sbr.rel (0) target = $region21
    $region20: #{tpu_custom_call.1} parent=1 // pred_region
      _
    $region21: #{tpu_custom_call.1} parent=1 // pred_fallthru
      _
    // Predicated region
    $region22: #{tpu_custom_call.1} parent=1 // pred_check
      _
    $region23: #{tpu_custom_call.1} parent=1 // pred_check_branch
      %35 = sbr.rel (0) target = $region25
    $region24: #{tpu_custom_call.1} parent=1 // pred_region
      _
    $region25: #{tpu_custom_call.1} parent=1 // pred_fallthru
      _
    // Predicated region
    $region26: #{tpu_custom_call.1} parent=1 // pred_check
      _
    $region27: #{tpu_custom_call.1} parent=1 // pred_check_branch
      %37 = sbr.rel (0) target = $region29
    $region28: #{tpu_custom_call.1} parent=1 // pred_region
      _
    $region29: #{tpu_custom_call.1} parent=1 // pred_fallthru
      _
    // Predicated region
    $region30: #{tpu_custom_call.1} parent=1 // pred_check
      _
    $region31: #{tpu_custom_call.1} parent=1 // pred_check_branch
      %39 = sbr.rel (0) target = $region33
    $region32: #{tpu_custom_call.1} parent=1 // pred_region
      %40 = dma.done [#allocation3], 128
    $region33: #{tpu_custom_call.1} parent=1 // pred_fallthru
      _
    %v42 = vld [vmem:[%s0] sm:$0xff]
    %v43 = vld [vmem:[#allocation2] sm:$0xf]
    %v44 = vld [vmem:[#allocation2 + $0x4] sm:$0xf]
    %v45 = vld [vmem:[%s2] sm:$0x1]
    %v46 = vpack.c.bf16 %v42, %v42
    %v48 = vlaneseq
    %v49 = vshrl.u32 %v48, 7
    %v50 = vsub.s32 0, %v49
    %v51 = vrot.slane %v45, %v50
    %v55 = vunpack.c.l.b16 %v43
    %v56 = vunpack.c.l.b16 %v44
    %v57 = vpack.c.b16 %v56, %v55
    %vm59 = vcmask 130048
    %v61 = vsel %vm59, %v46, 0
    %63 = vmatprep.subr.bf16.mxu0 0
    %64 = vmatpush1.bf16.msra.mxu0 %v57
    %65 = vmatprep.subr.bf16.mxu0 0
    %66 = vmatpush1.bf16.msra.mxu0 0
    %67 = vmatprep.subr.bf16.mxu0 0
    %68 = vmatpush1.bf16.msra.mxu0 0
    %69 = vmatprep.subr.bf16.mxu0 0
    %70 = vmatpush1.bf16.msra.mxu0 0
    %71 = vmatprep.subr.bf16.mxu0 0
    %72 = vmatpush1.bf16.msra.mxu0 0
    %73 = vmatprep.subr.bf16.mxu0 0
    %74 = vmatpush1.bf16.msra.mxu0 0
    %75 = vmatprep.subr.bf16.mxu0 0
    %76 = vmatpush1.bf16.msra.mxu0 0
    %77 = vmatprep.subr.bf16.mxu0 0
    %78 = vmatpush1.bf16.msra.mxu0 0
    %79 = vmatprep.subr.bf16.mxu0 0
    %80 = vmatpush1.bf16.msra.mxu0 0
    %81 = vmatprep.subr.bf16.mxu0 0
    %82 = vmatpush1.bf16.msra.mxu0 0
    %83 = vmatprep.subr.bf16.mxu0 0
    %84 = vmatpush1.bf16.msra.mxu0 0
    %85 = vmatprep.subr.bf16.mxu0 0
    %86 = vmatpush1.bf16.msra.mxu0 0
    %87 = vmatprep.subr.bf16.mxu0 0
    %88 = vmatpush1.bf16.msra.mxu0 0
    %89 = vmatprep.subr.bf16.mxu0 0
    %90 = vmatpush1.bf16.msra.mxu0 0
    %91 = vmatprep.subr.bf16.mxu0 0
    %92 = vmatpush1.bf16.msra.mxu0 0
    %93 = vmatprep.subr.bf16.mxu0 0
    %94 = vmatpush1.bf16.msra.mxu0 0
    %95 = vmatprep.mubr.bf16.mxu0 0
    %96 = vmatmul.mubr.bf16.gmra.mrb[0].mxu0 %v61
    %v97 = vpop.f32.mrb[0].mxu0
    %v98 = vadd.f32 %v51, %v97
    %v99 = vpop.f32.mrb[0].mxu0
    %v100 = vpop.f32.mrb[0].mxu0
    %v101 = vpop.f32.mrb[0].mxu0
    %102 = vdwg.mxu0
    %v103 = vmul.f32 %v98, 0.5
    %v104 = vmul.f32 %v98, 0.70710677
    %v105 = verf.f32.pop %v104
    %v106 = vadd.f32 %v105, 1.0
    %v107 = vmul.f32 %v103, %v106
    %v108 = vld [vmem:[%s3] sm:$0xf]
    %v109 = vld [vmem:[%s3 + $0x4] sm:$0xf]
    %v110 = vld [vmem:[%s3 + $0x8] sm:$0xf]
    %v111 = vld [vmem:[%s3 + $0xc] sm:$0xf]
    %v112 = vld [vmem:[%s3 + $0x10] sm:$0xf]
    %v113 = vld [vmem:[%s3 + $0x14] sm:$0xf]
    %v114 = vld [vmem:[%s3 + $0x18] sm:$0xf]
    %v115 = vld [vmem:[%s3 + $0x1c] sm:$0xf]
    %v116 = vld [vmem:[%s3 + $0x20] sm:$0xf]
    %v117 = vld [vmem:[%s3 + $0x24] sm:$0xf]
    %v118 = vld [vmem:[%s3 + $0x28] sm:$0xf]
    %v119 = vld [vmem:[%s3 + $0x2c] sm:$0xf]
    %v120 = vld [vmem:[%s3 + $0x30] sm:$0xf]
    %v121 = vld [vmem:[%s3 + $0x34] sm:$0xf]
    %v122 = vld [vmem:[%s3 + $0x38] sm:$0xf]
    %v123 = vld [vmem:[%s3 + $0x3c] sm:$0xf]
    %v124 = vld [vmem:[%s4] sm:$0x1]
    %v125 = vpack.c.bf16 %v107, %v107
    %v127 = vlaneseq
    %v128 = vshrl.u32 %v127, 7
    %v129 = vsub.s32 0, %v128
    %v130 = vrot.slane %v124, %v129
    %v148 = vunpack.c.l.b16 %v108
    %v149 = vunpack.c.l.b16 %v109
    %v150 = vunpack.c.l.b16 %v110
    %v151 = vunpack.c.l.b16 %v111
    %v152 = vunpack.c.l.b16 %v112
    %v153 = vunpack.c.l.b16 %v113
    %v154 = vunpack.c.l.b16 %v114
    %v155 = vunpack.c.l.b16 %v115
    %v156 = vunpack.c.l.b16 %v116
    %v157 = vunpack.c.l.b16 %v117
    %v158 = vunpack.c.l.b16 %v118
    %v159 = vunpack.c.l.b16 %v119
    %v160 = vunpack.c.l.b16 %v120
    %v161 = vunpack.c.l.b16 %v121
    %v162 = vunpack.c.l.b16 %v122
    %v163 = vunpack.c.l.b16 %v123
    %v164 = vpack.c.b16 %v149, %v148
    %v165 = vpack.c.b16 %v151, %v150
    %v166 = vpack.c.b16 %v153, %v152
    %v167 = vpack.c.b16 %v155, %v154
    %v168 = vpack.c.b16 %v157, %v156
    %v169 = vpack.c.b16 %v159, %v158
    %v170 = vpack.c.b16 %v161, %v160
    %v171 = vpack.c.b16 %v163, %v162
    %180 = vmatprep.subr.bf16.mxu0 0
    %181 = vmatpush1.bf16.msra.mxu0 %v164
    %182 = vmatprep.subr.bf16.mxu0 0
    %183 = vmatpush1.bf16.msra.mxu0 %v165
    %184 = vmatprep.subr.bf16.mxu0 0
    %185 = vmatpush1.bf16.msra.mxu0 %v166
    %186 = vmatprep.subr.bf16.mxu0 0
    %187 = vmatpush1.bf16.msra.mxu0 %v167
    %188 = vmatprep.subr.bf16.mxu0 0
    %189 = vmatpush1.bf16.msra.mxu0 %v168
    %190 = vmatprep.subr.bf16.mxu0 0
    %191 = vmatpush1.bf16.msra.mxu0 %v169
    %192 = vmatprep.subr.bf16.mxu0 0
    %193 = vmatpush1.bf16.msra.mxu0 %v170
    %194 = vmatprep.subr.bf16.mxu0 0
    %195 = vmatpush1.bf16.msra.mxu0 %v171
    %196 = vmatprep.subr.bf16.mxu0 0
    %197 = vmatpush1.bf16.msra.mxu0 0
    %198 = vmatprep.subr.bf16.mxu0 0
    %199 = vmatpush1.bf16.msra.mxu0 0
    %200 = vmatprep.subr.bf16.mxu0 0
    %201 = vmatpush1.bf16.msra.mxu0 0
    %202 = vmatprep.subr.bf16.mxu0 0
    %203 = vmatpush1.bf16.msra.mxu0 0
    %204 = vmatprep.subr.bf16.mxu0 0
    %205 = vmatpush1.bf16.msra.mxu0 0
    %206 = vmatprep.subr.bf16.mxu0 0
    %207 = vmatpush1.bf16.msra.mxu0 0
    %208 = vmatprep.subr.bf16.mxu0 0
    %209 = vmatpush1.bf16.msra.mxu0 0
    %210 = vmatprep.subr.bf16.mxu0 0
    %211 = vmatpush1.bf16.msra.mxu0 0
    %212 = vmatprep.mubr.bf16.mxu0 0
    %213 = vmatmul.mubr.bf16.gmra.mrb[0].mxu0 %v125
    %v214 = vpop.f32.mrb[0].mxu0
    %v215 = vadd.f32 %v130, %v214
    %v216 = vpop.f32.mrb[0].mxu0
    %v217 = vpop.f32.mrb[0].mxu0
    %v218 = vpop.f32.mrb[0].mxu0
    %219 = vdwg.mxu0
    %v220 = vmul.f32 %v215, 0.5
    %v221 = vmul.f32 %v215, 0.70710677
    %v222 = verf.f32.pop %v221
    %v223 = vadd.f32 %v222, 1.0
    %v224 = vmul.f32 %v220, %v223
    %v225 = vld [vmem:[%s5] sm:$0xf]
    %v226 = vld [vmem:[%s5 + $0x4] sm:$0xf]
    %v227 = vld [vmem:[%s5 + $0x8] sm:$0xf]
    %v228 = vld [vmem:[%s5 + $0xc] sm:$0xf]
    %v229 = vld [vmem:[%s5 + $0x10] sm:$0xf]
    %v230 = vld [vmem:[%s5 + $0x14] sm:$0xf]
    %v231 = vld [vmem:[%s5 + $0x18] sm:$0xf]
    %v232 = vld [vmem:[%s5 + $0x1c] sm:$0xf]
    %v233 = vld [vmem:[%s5 + $0x20] sm:$0xf]
    %v234 = vld [vmem:[%s5 + $0x24] sm:$0xf]
    %v235 = vld [vmem:[%s5 + $0x28] sm:$0xf]
    %v236 = vld [vmem:[%s5 + $0x2c] sm:$0xf]
    %v237 = vld [vmem:[%s5 + $0x30] sm:$0xf]
    %v238 = vld [vmem:[%s5 + $0x34] sm:$0xf]
    %v239 = vld [vmem:[%s5 + $0x38] sm:$0xf]
    %v240 = vld [vmem:[%s5 + $0x3c] sm:$0xf]
    %v241 = vld [vmem:[%s6] sm:$0x1]
    %v242 = vpack.c.bf16 %v224, %v224
    %v244 = vlaneseq
    %v245 = vshrl.u32 %v244, 7
    %v246 = vsub.s32 0, %v245
    %v247 = vrot.slane %v241, %v246
    %v265 = vunpack.c.l.b16 %v225
    %v266 = vunpack.c.l.b16 %v226
    %v267 = vunpack.c.l.b16 %v227
    %v268 = vunpack.c.l.b16 %v228
    %v269 = vunpack.c.l.b16 %v229
    %v270 = vunpack.c.l.b16 %v230
    %v271 = vunpack.c.l.b16 %v231
    %v272 = vunpack.c.l.b16 %v232
    %v273 = vunpack.c.l.b16 %v233
    %v274 = vunpack.c.l.b16 %v234
    %v275 = vunpack.c.l.b16 %v235
    %v276 = vunpack.c.l.b16 %v236
    %v277 = vunpack.c.l.b16 %v237
    %v278 = vunpack.c.l.b16 %v238
    %v279 = vunpack.c.l.b16 %v239
    %v280 = vunpack.c.l.b16 %v240
    %v281 = vpack.c.b16 %v266, %v265
    %v282 = vpack.c.b16 %v268, %v267
    %v283 = vpack.c.b16 %v270, %v269
    %v284 = vpack.c.b16 %v272, %v271
    %v285 = vpack.c.b16 %v274, %v273
    %v286 = vpack.c.b16 %v276, %v275
    %v287 = vpack.c.b16 %v278, %v277
    %v288 = vpack.c.b16 %v280, %v279
    %297 = vmatprep.subr.bf16.mxu0 0
    %298 = vmatpush1.bf16.msra.mxu0 %v281
    %299 = vmatprep.subr.bf16.mxu0 0
    %300 = vmatpush1.bf16.msra.mxu0 %v282
    %301 = vmatprep.subr.bf16.mxu0 0
    %302 = vmatpush1.bf16.msra.mxu0 %v283
    %303 = vmatprep.subr.bf16.mxu0 0
    %304 = vmatpush1.bf16.msra.mxu0 %v284
    %305 = vmatprep.subr.bf16.mxu0 0
    %306 = vmatpush1.bf16.msra.mxu0 %v285
    %307 = vmatprep.subr.bf16.mxu0 0
    %308 = vmatpush1.bf16.msra.mxu0 %v286
    %309 = vmatprep.subr.bf16.mxu0 0
    %310 = vmatpush1.bf16.msra.mxu0 %v287
    %311 = vmatprep.subr.bf16.mxu0 0
    %312 = vmatpush1.bf16.msra.mxu0 %v288
    %313 = vmatprep.subr.bf16.mxu0 0
    %314 = vmatpush1.bf16.msra.mxu0 0
    %315 = vmatprep.subr.bf16.mxu0 0
    %316 = vmatpush1.bf16.msra.mxu0 0
    %317 = vmatprep.subr.bf16.mxu0 0
    %318 = vmatpush1.bf16.msra.mxu0 0
    %319 = vmatprep.subr.bf16.mxu0 0
    %320 = vmatpush1.bf16.msra.mxu0 0
    %321 = vmatprep.subr.bf16.mxu0 0
    %322 = vmatpush1.bf16.msra.mxu0 0
    %323 = vmatprep.subr.bf16.mxu0 0
    %324 = vmatpush1.bf16.msra.mxu0 0
    %325 = vmatprep.subr.bf16.mxu0 0
    %326 = vmatpush1.bf16.msra.mxu0 0
    %327 = vmatprep.subr.bf16.mxu0 0
    %328 = vmatpush1.bf16.msra.mxu0 0
    %329 = vmatprep.mubr.bf16.mxu0 0
    %330 = vmatmul.mubr.bf16.gmra.mrb[0].mxu0 %v242
    %v331 = vpop.f32.mrb[0].mxu0
    %v332 = vadd.f32 %v247, %v331
    %v333 = vpop.f32.mrb[0].mxu0
    %v334 = vpop.f32.mrb[0].mxu0
    %v335 = vpop.f32.mrb[0].mxu0
    %336 = vdwg.mxu0
    %vm337 = vcmask 64512
    %338 = vst.msk [vmem:[#allocation5] sm:$0xff] %vm337, %v332
    // Predicated region
    $region34: #{tpu_custom_call.1} parent=1 // pred_check
      _
    $region35: #{tpu_custom_call.1} parent=1 // pred_check_branch
      %340 = sbr.rel (0) target = $region37
    $region36: #{tpu_custom_call.1} parent=1 // pred_region
      %s342 = ssub.s32 128, 128
      %343 = vsyncadd [#allocation4], %s342
      %s345 = sshll.u32 [#allocation5], 4
      %s346 = int_to_ptr.vmem [resolvable:$true] %s345
      %348 = dma.vmem_to_hbm [thread:$0]  %s346, 128, %s7, [#allocation4]
    $region37: #{tpu_custom_call.1} parent=1 // pred_fallthru
      _
    // Predicated region
    $region38: #{tpu_custom_call.1} parent=1 // pred_check
      _
    $region39: #{tpu_custom_call.1} parent=1 // pred_check_branch
      %350 = sbr.rel (0) target = $region41
    $region40: #{tpu_custom_call.1} parent=1 // pred_region
      %351 = dma.done [#allocation4], 128
    $region41: #{tpu_custom_call.1} parent=1 // pred_fallthru
      _
    %352 = vsyncpa [#allocation3], 1
    %353 = vsyncpa [#allocation4], 1

</llo_original>
